<compile_context>
chip_gen: v5e
topology: v5e:2x2
jax: 0.10.0
libtpu: 0.0.40
codegen_flags: <defaults>
</compile_context>

<pallas_src>
import jax
import jax.numpy as jnp
from jax import lax
from jax.experimental import pallas as pl
from jax.experimental.pallas import tpu as pltpu


def _match_kernel(geo_ref, lang_ref, w_ref, w5t_ref, v_ref, out_ref):
    """One tile of packed rows.

    geo_ref/lang_ref: (TMp, Hp)  activation streams (bf16 preferred)
    w_ref   : (5, Hp, Hp) bf16   block-diag [w1_geo, w1_lang, w2, w3, w4+BN3]
    w5t_ref : (P, Hp)     bf16   block-diag w5^T (BN4 folded)
    v_ref   : (6, Hp)     f32    [b1, prelu_alpha, b2, b3, b4, b5] lane-tiled
    out_ref : (P, TMp)    f32    out[j, r] = score of original row r*P + j
    """
    f32, bf16 = jnp.float32, jnp.bfloat16
    geo = geo_ref[...].astype(bf16)      # no-op when the stream is already bf16
    lang = lang_ref[...].astype(bf16)

    b1 = v_ref[0:1, :]
    alpha = v_ref[1:2, :]
    b2 = v_ref[2:3, :]
    b3 = v_ref[3:4, :]
    b4 = v_ref[4:5, :]
    b5 = v_ref[5:6, 0:1]                 # (1, 1) bias of the H->1 head

    # ---- fuse: Conv1d(2H->H,1) (+BN1 folded) -> PReLU -> Conv1d(H->H,1) ----
    h = (jnp.dot(geo, w_ref[0], preferred_element_type=f32)
         + jnp.dot(lang, w_ref[1], preferred_element_type=f32) + b1)
    h = jnp.where(h > 0.0, h, alpha * h)                     # per-channel PReLU
    h = jnp.dot(h.astype(bf16), w_ref[2], preferred_element_type=f32) + b2

    # ---- match: Conv->ReLU->(BN3 folded)Conv->ReLU->(BN4 folded)Conv(H->1) --
    m = jnp.maximum(
        jnp.dot(h.astype(bf16), w_ref[3], preferred_element_type=f32) + b3, 0.0)
    m = jnp.maximum(
        jnp.dot(m.astype(bf16), w_ref[4], preferred_element_type=f32) + b4, 0.0)

    # Final H->1 per packed chunk, contracted over lanes so the result lands as
    # a lane-dense (P, TMp) slab (no narrow (TMp, P) stores, no relayout).
    score = lax.dot_general(
        w5t_ref[...], m.astype(bf16),
        dimension_numbers=(((1,), (1,)), ((), ())),
        preferred_element_type=f32) + b5
    out_ref[...] = score


def match_module_forward(geo_feats, lang_feat, params, *,
                         target_steps=8, max_tile_p=8192):
    """geo_feats: (B, K, H), lang_feat: (B, K, H) -> object_scores (B, K)."""
    B, K, H = geo_feats.shape
    assert lang_feat.shape == (B, K, H)
    N = B * K

    # Pack P rows per 128-lane row when shapes allow; else lane-sparse fallback.
    P = 128 // H if (128 % H == 0 and N % max(1, 128 // H) == 0) else 1
    Hp = P * H
    Np = N // P

    # Free, contiguous reshapes -- no pad, no standalone dtype cast on the
    # activation streams (the kernel casts in-register if the producer is f32).
    geo2d = geo_feats.reshape(Np, Hp)
    lang2d = lang_feat.reshape(Np, Hp)

    # ---- fold eval-mode BatchNorm affines + biases into the conv weights ----
    f32, bf16 = jnp.float32, jnp.bfloat16
    s1, t1 = params["bn1_scale"], params["bn1_shift"]
    w1 = params["w1"] * s1                     # BN1 after conv1 (scales out-ch)
    b1 = params["b1"] * s1 + t1
    w1g, w1l = w1[:H], w1[H:]                  # split: no (N, 2H) concat stream
    s3, t3 = params["bn3_scale"], params["bn3_shift"]
    w4 = params["w4"] * s3.T                   # BN3 folded into conv4 input rows
    b4 = params["b4"] + t3 @ params["w4"]
    s4, t4 = params["bn4_scale"], params["bn4_shift"]
    w5 = params["w5"] * s4.T                   # (H, 1): BN4 folded into conv5
    b5 = params["b5"] + t4 @ params["w5"]      # (1, 1)

    # Block-diagonalize each HxH weight to (Hp, Hp) so packed 128-lane rows stay
    # independent; coalesce parameters into 3 slabs (fewer DMA descriptors).
    eye = jnp.eye(P, dtype=f32)
    bd = lambda w: jnp.kron(eye, w.astype(f32))
    wstack = jnp.stack(
        [bd(w1g), bd(w1l), bd(params["w2"]), bd(params["w3"]), bd(w4)],
        axis=0).astype(bf16)                                   # (5, Hp, Hp)
    w5t = jnp.kron(eye, w5.T.astype(f32)).astype(bf16)         # (P, Hp)
    tile = lambda v: jnp.tile(v.astype(f32), (1, P))
    vslab = jnp.concatenate(
        [tile(b1), tile(params["prelu_alpha"]), tile(params["b2"]),
         tile(params["b3"]), tile(b4),
         jnp.broadcast_to(b5.astype(f32), (1, Hp))], axis=0)   # (6, Hp)

    # ---- grid: few, large tiles (per-step pipeline overhead dominates) ------
    if Np <= 1024:
        tile_p = Np                      # single step; block equals full array
    else:
        tile_p = min(max_tile_p, pl.cdiv(Np, target_steps))
        tile_p = pl.cdiv(tile_p, 128) * 128   # lane-dense output, >=2 steps
    n_tiles = pl.cdiv(Np, tile_p)        # ragged last tile read as partial block

    act_spec = pl.BlockSpec((tile_p, Hp), lambda i: (i, 0))
    in_specs = [
        act_spec, act_spec,
        pl.BlockSpec((5, Hp, Hp), lambda i: (0, 0, 0)),
        pl.BlockSpec((P, Hp), lambda i: (0, 0)),
        pl.BlockSpec((6, Hp), lambda i: (0, 0)),
    ]
    out_spec = pl.BlockSpec((P, tile_p), lambda i: (0, i))

    act_bytes = jnp.dtype(geo2d.dtype).itemsize
    cost = pl.CostEstimate(
        flops=2 * n_tiles * tile_p * (5 * Hp * Hp + P * Hp),
        transcendentals=0,
        bytes_accessed=(2 * Np * Hp * act_bytes + P * Np * 4
                        + 2 * (5 * Hp * Hp + P * Hp) + 4 * 6 * Hp))

    out = pl.pallas_call(
        _match_kernel,
        out_shape=jax.ShapeDtypeStruct((P, Np), jnp.float32),
        grid=(n_tiles,),
        in_specs=in_specs,
        out_specs=out_spec,
        compiler_params=pltpu.CompilerParams(
            dimension_semantics=("parallel",),
            vmem_limit_bytes=32 * 1024 * 1024),
        cost_estimate=cost,
    )(geo2d, lang2d, wstack, w5t, vslab)

    # out[j, r] = score of row r*P + j  ->  transpose + flatten restores order.
    return out.T.reshape(B, K)


def init_params(key, hidden_size):
    """Deterministic synthetic parameters matching the module's shapes."""
    H = hidden_size
    ks = jax.random.split(key, 16)
    eps = 1e-5

    def conv_w(k, cin, cout, scale=0.1):
        # Stored pre-transposed as (cin, cout) so the forward does X @ W.
        return (scale * jax.random.normal(k, (cin, cout))).astype(jnp.float32)

    def vec(k, cout, scale=0.05):
        return (scale * jax.random.normal(k, (1, cout))).astype(jnp.float32)

    def bn_fold(k, c):
        gamma = 1.0 + 0.1 * jax.random.normal(k, (1, c))
        beta = 0.05 * jax.random.normal(jax.random.fold_in(k, 1), (1, c))
        running_mean = jnp.zeros((1, c))
        running_var = jnp.ones((1, c))
        scale = gamma / jnp.sqrt(running_var + eps)
        shift = beta - running_mean * scale
        return scale.astype(jnp.float32), shift.astype(jnp.float32)

    bn1_scale, bn1_shift = bn_fold(ks[2], H)
    bn3_scale, bn3_shift = bn_fold(ks[8], H)
    bn4_scale, bn4_shift = bn_fold(ks[11], H)

    return {
        # fuse
        "w1": conv_w(ks[0], 2 * H, H), "b1": vec(ks[1], H),
        "bn1_scale": bn1_scale, "bn1_shift": bn1_shift,
        "prelu_alpha": jnp.full((1, H), 0.25, jnp.float32),
        "w2": conv_w(ks[3], H, H), "b2": vec(ks[4], H),
        # match
        "w3": conv_w(ks[5], H, H), "b3": vec(ks[6], H),
        "bn3_scale": bn3_scale, "bn3_shift": bn3_shift,
        "w4": conv_w(ks[9], H, H), "b4": vec(ks[10], H),
        "bn4_scale": bn4_scale, "bn4_shift": bn4_shift,
        "w5": conv_w(ks[12], H, 1), "b5": vec(ks[13], 1),
    }


def reference_forward(geo_feats, lang_feat, p):
    """Pure-JAX f32 reference mirroring the PyTorch forward (eval-mode BN)."""
    x = jnp.concatenate([geo_feats, lang_feat], axis=-1)       # (B, K, 2H)
    B, K, C = x.shape
    x = x.reshape(B * K, C)
    h = x @ p["w1"] + p["b1"]
    h = h * p["bn1_scale"] + p["bn1_shift"]
    h = jnp.where(h > 0, h, p["prelu_alpha"] * h)
    h = h @ p["w2"] + p["b2"]
    m = jnp.maximum(h @ p["w3"] + p["b3"], 0.0)
    m = m * p["bn3_scale"] + p["bn3_shift"]
    m = jnp.maximum(m @ p["w4"] + p["b4"], 0.0)
    m = m * p["bn4_scale"] + p["bn4_shift"]
    s = m @ p["w5"] + p["b5"]
    return s[:, 0].reshape(B, K)


if __name__ == "__main__":
    H = 32                       # hidden_size
    key = jax.random.PRNGKey(0)
    k_geo, k_lang, k_par = jax.random.split(key, 3)
    params = init_params(k_par, H)

    # Primary spec-sized check (B=2, K=16) plus one ragged multi-tile check.
    for (B, K) in [(2, 16), (1, 5000)]:
        kg = jax.random.fold_in(k_geo, K)
        kl = jax.random.fold_in(k_lang, K)
        # The producer emits bf16 activations; the kernel streams them as-is.
        geo_feats = jax.random.normal(kg, (B, K, H), jnp.float32).astype(jnp.bfloat16)
        lang_feat = jax.random.normal(kl, (B, K, H), jnp.float32).astype(jnp.bfloat16)

        scores = match_module_forward(geo_feats, lang_feat, params)
        scores = jax.block_until_ready(scores)
        assert scores.shape == (B, K)

        ref = reference_forward(geo_feats.astype(jnp.float32),
                                lang_feat.astype(jnp.float32), params)
        # Tolerance covers bf16 weight/activation rounding vs the f32 reference.
        assert jnp.allclose(scores, ref, atol=2e-2, rtol=2e-2), (
            f"mismatch vs reference at (B,K)=({B},{K}): "
            f"max|d|={float(jnp.max(jnp.abs(scores - ref))):.3e}")

    print("KERNEL_OK")
</pallas_src>

<mosaic_0001>
module attributes {stable_mosaic.version = 11 : i64} {
  func.func @_match_kernel(%arg0: i32, %arg1: memref<8x128xbf16, #tpu.memory_space<vmem>>, %arg2: memref<8x128xbf16, #tpu.memory_space<vmem>>, %arg3: memref<5x128x128xbf16, #tpu.memory_space<vmem>>, %arg4: memref<4x128xbf16, #tpu.memory_space<vmem>>, %arg5: memref<6x128xf32, #tpu.memory_space<vmem>>, %arg6: memref<4x8xf32, #tpu.memory_space<vmem>>) attributes {dimension_semantics = [#tpu.dimension_semantics<parallel>], iteration_bounds = array<i64: 1>, scalar_prefetch = 0 : i64, scratch_operands = 0 : i64, tpu.core_type = #tpu.core_type<tc>, window_params = [{transform_indices = @transform_0, window_bounds = array<i64: 8, 128>}, {transform_indices = @transform_1, window_bounds = array<i64: 8, 128>}, {pipeline_mode = #tpu.pipeline_mode<synchronous>, transform_indices = @transform_2, window_bounds = array<i64: 5, 128, 128>}, {pipeline_mode = #tpu.pipeline_mode<synchronous>, transform_indices = @transform_3, window_bounds = array<i64: 4, 128>}, {pipeline_mode = #tpu.pipeline_mode<synchronous>, transform_indices = @transform_4, window_bounds = array<i64: 6, 128>}, {transform_indices = @transform_5, window_bounds = array<i64: 4, 8>}]} {
    %c0 = arith.constant 0 : index
    %c0_0 = arith.constant 0 : index
    %0 = vector.load %arg1[%c0, %c0_0] : memref<8x128xbf16, #tpu.memory_space<vmem>>, vector<8x128xbf16>
    %c0_1 = arith.constant 0 : index
    %c0_2 = arith.constant 0 : index
    %1 = vector.load %arg2[%c0_1, %c0_2] : memref<8x128xbf16, #tpu.memory_space<vmem>>, vector<8x128xbf16>
    %c0_3 = arith.constant 0 : index
    %c0_4 = arith.constant 0 : index
    %2 = vector.load %arg5[%c0_3, %c0_4] : memref<6x128xf32, #tpu.memory_space<vmem>>, vector<1x128xf32>
    %c1 = arith.constant 1 : index
    %c0_5 = arith.constant 0 : index
    %3 = vector.load %arg5[%c1, %c0_5] : memref<6x128xf32, #tpu.memory_space<vmem>>, vector<1x128xf32>
    %c2 = arith.constant 2 : index
    %c0_6 = arith.constant 0 : index
    %4 = vector.load %arg5[%c2, %c0_6] : memref<6x128xf32, #tpu.memory_space<vmem>>, vector<1x128xf32>
    %c3 = arith.constant 3 : index
    %c0_7 = arith.constant 0 : index
    %5 = vector.load %arg5[%c3, %c0_7] : memref<6x128xf32, #tpu.memory_space<vmem>>, vector<1x128xf32>
    %c4 = arith.constant 4 : index
    %c0_8 = arith.constant 0 : index
    %6 = vector.load %arg5[%c4, %c0_8] : memref<6x128xf32, #tpu.memory_space<vmem>>, vector<1x128xf32>
    %c5 = arith.constant 5 : index
    %c0_9 = arith.constant 0 : index
    %7 = vector.load %arg5[%c5, %c0_9] : memref<6x128xf32, #tpu.memory_space<vmem>>, vector<1x1xf32>
    %c0_10 = arith.constant 0 : index
    %c0_11 = arith.constant 0 : index
    %c0_12 = arith.constant 0 : index
    %8 = vector.load %arg3[%c0_10, %c0_11, %c0_12] : memref<5x128x128xbf16, #tpu.memory_space<vmem>>, vector<1x128x128xbf16>
    %9 = vector.shape_cast %8 : vector<1x128x128xbf16> to vector<128x128xbf16>
    %cst = arith.constant dense<0.000000e+00> : vector<8x128xf32>
    %10 = tpu.matmul %0, %9, %cst {dimension_numbers = #tpu.dot_dimension_numbers<[1], [0], [0], [1], [0, 0, 1, 1], [], []>} : vector<8x128xbf16>, vector<128x128xbf16>, vector<8x128xf32> -> vector<8x128xf32>
    %c1_13 = arith.constant 1 : index
    %c0_14 = arith.constant 0 : index
    %c0_15 = arith.constant 0 : index
    %11 = vector.load %arg3[%c1_13, %c0_14, %c0_15] : memref<5x128x128xbf16, #tpu.memory_space<vmem>>, vector<1x128x128xbf16>
    %12 = vector.shape_cast %11 : vector<1x128x128xbf16> to vector<128x128xbf16>
    %cst_16 = arith.constant dense<0.000000e+00> : vector<8x128xf32>
    %13 = tpu.matmul %1, %12, %cst_16 {dimension_numbers = #tpu.dot_dimension_numbers<[1], [0], [0], [1], [0, 0, 1, 1], [], []>} : vector<8x128xbf16>, vector<128x128xbf16>, vector<8x128xf32> -> vector<8x128xf32>
    %14 = arith.addf %10, %13 : vector<8x128xf32>
    %15 = vector.broadcast %2 : vector<1x128xf32> to vector<8x128xf32>
    %16 = arith.addf %14, %15 : vector<8x128xf32>
    %cst_17 = arith.constant 0.000000e+00 : f32
    %17 = vector.broadcast %cst_17 : f32 to vector<8x128xf32>
    %18 = arith.cmpf ogt, %16, %17 : vector<8x128xf32>
    %19 = vector.broadcast %3 : vector<1x128xf32> to vector<8x128xf32>
    %20 = arith.mulf %19, %16 : vector<8x128xf32>
    %21 = arith.select %18, %16, %20 : vector<8x128xi1>, vector<8x128xf32>
    %22 = arith.truncf %21 : vector<8x128xf32> to vector<8x128xbf16>
    %c2_18 = arith.constant 2 : index
    %c0_19 = arith.constant 0 : index
    %c0_20 = arith.constant 0 : index
    %23 = vector.load %arg3[%c2_18, %c0_19, %c0_20] : memref<5x128x128xbf16, #tpu.memory_space<vmem>>, vector<1x128x128xbf16>
    %24 = vector.shape_cast %23 : vector<1x128x128xbf16> to vector<128x128xbf16>
    %cst_21 = arith.constant dense<0.000000e+00> : vector<8x128xf32>
    %25 = tpu.matmul %22, %24, %cst_21 {dimension_numbers = #tpu.dot_dimension_numbers<[1], [0], [0], [1], [0, 0, 1, 1], [], []>} : vector<8x128xbf16>, vector<128x128xbf16>, vector<8x128xf32> -> vector<8x128xf32>
    %26 = vector.broadcast %4 : vector<1x128xf32> to vector<8x128xf32>
    %27 = arith.addf %25, %26 : vector<8x128xf32>
    %28 = arith.truncf %27 : vector<8x128xf32> to vector<8x128xbf16>
    %c3_22 = arith.constant 3 : index
    %c0_23 = arith.constant 0 : index
    %c0_24 = arith.constant 0 : index
    %29 = vector.load %arg3[%c3_22, %c0_23, %c0_24] : memref<5x128x128xbf16, #tpu.memory_space<vmem>>, vector<1x128x128xbf16>
    %30 = vector.shape_cast %29 : vector<1x128x128xbf16> to vector<128x128xbf16>
    %cst_25 = arith.constant dense<0.000000e+00> : vector<8x128xf32>
    %31 = tpu.matmul %28, %30, %cst_25 {dimension_numbers = #tpu.dot_dimension_numbers<[1], [0], [0], [1], [0, 0, 1, 1], [], []>} : vector<8x128xbf16>, vector<128x128xbf16>, vector<8x128xf32> -> vector<8x128xf32>
    %32 = vector.broadcast %5 : vector<1x128xf32> to vector<8x128xf32>
    %33 = arith.addf %31, %32 : vector<8x128xf32>
    %cst_26 = arith.constant 0.000000e+00 : f32
    %34 = vector.broadcast %cst_26 : f32 to vector<8x128xf32>
    %35 = arith.maximumf %33, %34 : vector<8x128xf32>
    %36 = arith.truncf %35 : vector<8x128xf32> to vector<8x128xbf16>
    %c4_27 = arith.constant 4 : index
    %c0_28 = arith.constant 0 : index
    %c0_29 = arith.constant 0 : index
    %37 = vector.load %arg3[%c4_27, %c0_28, %c0_29] : memref<5x128x128xbf16, #tpu.memory_space<vmem>>, vector<1x128x128xbf16>
    %38 = vector.shape_cast %37 : vector<1x128x128xbf16> to vector<128x128xbf16>
    %cst_30 = arith.constant dense<0.000000e+00> : vector<8x128xf32>
    %39 = tpu.matmul %36, %38, %cst_30 {dimension_numbers = #tpu.dot_dimension_numbers<[1], [0], [0], [1], [0, 0, 1, 1], [], []>} : vector<8x128xbf16>, vector<128x128xbf16>, vector<8x128xf32> -> vector<8x128xf32>
    %40 = vector.broadcast %6 : vector<1x128xf32> to vector<8x128xf32>
    %41 = arith.addf %39, %40 : vector<8x128xf32>
    %cst_31 = arith.constant 0.000000e+00 : f32
    %42 = vector.broadcast %cst_31 : f32 to vector<8x128xf32>
    %43 = arith.maximumf %41, %42 : vector<8x128xf32>
    %c0_32 = arith.constant 0 : index
    %c0_33 = arith.constant 0 : index
    %44 = vector.load %arg4[%c0_32, %c0_33] : memref<4x128xbf16, #tpu.memory_space<vmem>>, vector<4x128xbf16>
    %45 = arith.truncf %43 : vector<8x128xf32> to vector<8x128xbf16>
    %cst_34 = arith.constant dense<0.000000e+00> : vector<4x8xf32>
    %46 = tpu.matmul %44, %45, %cst_34 {dimension_numbers = #tpu.dot_dimension_numbers<[1], [1], [0], [0], [0, 0, 1, 0], [], []>} : vector<4x128xbf16>, vector<8x128xbf16>, vector<4x8xf32> -> vector<4x8xf32>
    %47 = vector.broadcast %7 : vector<1x1xf32> to vector<4x8xf32>
    %48 = arith.addf %46, %47 : vector<4x8xf32>
    %c0_35 = arith.constant 0 : index
    %c0_36 = arith.constant 0 : index
    %49 = vector.load %arg6[%c0_35, %c0_36] : memref<4x8xf32, #tpu.memory_space<vmem>>, vector<4x8xf32>
    tpu.vector_store %arg6[%c0_35, %c0_36], %48 {strides = array<i32>} : memref<4x8xf32, #tpu.memory_space<vmem>>, vector<4x8xf32>,
    return
  }
  func.func @transform_0(%arg0: i32) -> (i32, i32) {
    %c0_i32 = arith.constant 0 : i32
    %c0_i32_0 = arith.constant 0 : i32
    return %arg0, %c0_i32 : i32, i32
  }
  func.func @transform_1(%arg0: i32) -> (i32, i32) {
    %c0_i32 = arith.constant 0 : i32
    %c0_i32_0 = arith.constant 0 : i32
    return %arg0, %c0_i32 : i32, i32
  }
  func.func @transform_2(%arg0: i32) -> (i32, i32, i32) {
    %c0_i32 = arith.constant 0 : i32
    %c0_i32_0 = arith.constant 0 : i32
    %c0_i32_1 = arith.constant 0 : i32
    %c0_i32_2 = arith.constant 0 : i32
    return %c0_i32, %c0_i32_0, %c0_i32_1 : i32, i32, i32
  }
  func.func @transform_3(%arg0: i32) -> (i32, i32) {
    %c0_i32 = arith.constant 0 : i32
    %c0_i32_0 = arith.constant 0 : i32
    %c0_i32_1 = arith.constant 0 : i32
    return %c0_i32, %c0_i32_0 : i32, i32
  }
  func.func @transform_4(%arg0: i32) -> (i32, i32) {
    %c0_i32 = arith.constant 0 : i32
    %c0_i32_0 = arith.constant 0 : i32
    %c0_i32_1 = arith.constant 0 : i32
    return %c0_i32, %c0_i32_0 : i32, i32
  }
  func.func @transform_5(%arg0: i32) -> (i32, i32) {
    %c0_i32 = arith.constant 0 : i32
    %c0_i32_0 = arith.constant 0 : i32
    return %c0_i32, %arg0 : i32, i32
  }
}

</mosaic_0001>

<llo_original>
// kernel: tpu_custom_call.1
$region0: #{tpu_custom_call.1}
  #allocation0 [shape = 'u32[]', space=smem, size = 0x4, offset = 0x4, fixed_abs, tag = 'smem constant byte address 0x4 - core index']
  #allocation1 [shape = 'u32[72,128]{1,0:T(1,128)}', space=vmem, size = 0x9000, scoped, tag = 'internal scratch']
  %s0 = inlined_call_operand.hbm [shape: bf16[8,128], index: 0, kind: input, shape index: {}]
  %s1 = inlined_call_operand.hbm [shape: bf16[8,128], index: 1, kind: input, shape index: {}]
  %s2 = inlined_call_operand.hbm [shape: bf16[5,128,128], index: 2, kind: input, shape index: {}]
  %s3 = inlined_call_operand.vmem [shape: bf16[4,128], index: 3, kind: input, shape index: {}]
  %s4 = inlined_call_operand.hbm [shape: f32[6,128], index: 4, kind: input, shape index: {}]
  %s5 = inlined_call_operand.hbm [shape: f32[4,8], index: 5, kind: output, shape index: {}]
  %s6 = sld [smem:[#allocation0]]
  $region46: #{tpu_custom_call.1} parent=0
    _
  %s8 = ssub.s32 1, %s6
  %s9 = scalar_select 0, %s8, %s6
  $region1: #{tpu_custom_call.1} parent=0
    #allocation2 [shape = 'u8[2048]{0}', space=vmem, size = 0x800, scoped, tag = 'input window, operand 0, single buffered']
    #allocation3 [shape = 's32[1]{0}', space=sflag, size = 0x4, scoped, tag = 'scoped memory for tpu_custom_call.1']
    #allocation4 [shape = 's32[1]{0}', space=sflag, size = 0x4, scoped, tag = 'scoped memory for tpu_custom_call.1']
    #allocation5 [shape = 'u8[2048]{0}', space=vmem, size = 0x800, scoped, tag = 'input window, operand 1, single buffered']
    #allocation6 [shape = 's32[1]{0}', space=sflag, size = 0x4, scoped, tag = 'scoped memory for tpu_custom_call.1']
    #allocation7 [shape = 'u8[163840]{0}', space=vmem, size = 0x28000, scoped, tag = 'input window, operand 2, single buffered']
    #allocation8 [shape = 'u8[4096]{0}', space=vmem, size = 0x1000, scoped, tag = 'input window, operand 4, single buffered']
    #allocation9 [shape = 's32[1]{0}', space=sflag, size = 0x4, scoped, tag = 'scoped memory for tpu_custom_call.1']
    #allocation10 [shape = 'u8[2048]{0}', space=vmem, size = 0x800, scoped, tag = 'output window, operand 0, single buffered']
    %10 = vsyncpa [#allocation3], 0
    %11 = vsyncpa [#allocation6], 0
    %12 = vsyncpa [#allocation9], 0
    %13 = vsyncpa [#allocation4], 0
    // Predicated region
    $region2: #{tpu_custom_call.1} parent=1 // pred_check
      _
    $region3: #{tpu_custom_call.1} parent=1 // pred_check_branch
      %15 = sbr.rel (0) target = $region5
    $region4: #{tpu_custom_call.1} parent=1 // pred_region
      %17 = vsyncadd [#allocation3], 0
      %s19 = sshll.u32 %s0, 4
      %s20 = int_to_ptr.hbm [resolvable:$true] %s19
      %s21 = sshll.u32 [#allocation2], 4
      %s22 = int_to_ptr.vmem [resolvable:$true] %s21
      %24 = dma.hbm_to_vmem [thread:$0]  %s20, 64, %s22, [#allocation3]
    $region5: #{tpu_custom_call.1} parent=1 // pred_fallthru
      _
    // Predicated region
    $region6: #{tpu_custom_call.1} parent=1 // pred_check
      _
    $region7: #{tpu_custom_call.1} parent=1 // pred_check_branch
      %26 = sbr.rel (0) target = $region9
    $region8: #{tpu_custom_call.1} parent=1 // pred_region
      %28 = vsyncadd [#allocation6], 0
      %s30 = sshll.u32 %s1, 4
      %s31 = int_to_ptr.hbm [resolvable:$true] %s30
      %s32 = sshll.u32 [#allocation5], 4
      %s33 = int_to_ptr.vmem [resolvable:$true] %s32
      %35 = dma.hbm_to_vmem [thread:$0]  %s31, 64, %s33, [#allocation6]
    $region9: #{tpu_custom_call.1} parent=1 // pred_fallthru
      _
    // Predicated region
    $region10: #{tpu_custom_call.1} parent=1 // pred_check
      _
    $region11: #{tpu_custom_call.1} parent=1 // pred_check_branch
      %37 = sbr.rel (0) target = $region13
    $region12: #{tpu_custom_call.1} parent=1 // pred_region
      %39 = vsyncadd [#allocation6], 0
      %s40 = sshll.u32 %s2, 4
      %s41 = int_to_ptr.hbm [resolvable:$true] %s40
      %s42 = sshll.u32 [#allocation7], 4
      %s43 = int_to_ptr.vmem [resolvable:$true] %s42
      %48 = dma.hbm_to_vmem [thread:$0]  %s41, 5120, %s43, [#allocation6], 64, 64, 4
    $region13: #{tpu_custom_call.1} parent=1 // pred_fallthru
      _
    // Predicated region
    $region14: #{tpu_custom_call.1} parent=1 // pred_check
      _
    $region15: #{tpu_custom_call.1} parent=1 // pred_check_branch
      %50 = sbr.rel (0) target = $region17
    $region16: #{tpu_custom_call.1} parent=1 // pred_region
      _
    $region17: #{tpu_custom_call.1} parent=1 // pred_fallthru
      _
    // Predicated region
    $region18: #{tpu_custom_call.1} parent=1 // pred_check
      _
    $region19: #{tpu_custom_call.1} parent=1 // pred_check_branch
      %52 = sbr.rel (0) target = $region21
    $region20: #{tpu_custom_call.1} parent=1 // pred_region
      %54 = vsyncadd [#allocation9], 0
      %s56 = sshll.u32 %s4, 4
      %s57 = int_to_ptr.hbm [resolvable:$true] %s56
      %s58 = sshll.u32 [#allocation8], 4
      %s59 = int_to_ptr.vmem [resolvable:$true] %s58
      %61 = dma.hbm_to_vmem [thread:$0]  %s57, 128, %s59, [#allocation9]
    $region21: #{tpu_custom_call.1} parent=1 // pred_fallthru
      _
    // Predicated region
    $region22: #{tpu_custom_call.1} parent=1 // pred_check
      _
    $region23: #{tpu_custom_call.1} parent=1 // pred_check_branch
      %63 = sbr.rel (0) target = $region25
    $region24: #{tpu_custom_call.1} parent=1 // pred_region
      %65 = dma.done [#allocation3], 64
    $region25: #{tpu_custom_call.1} parent=1 // pred_fallthru
      _
    // Predicated region
    $region26: #{tpu_custom_call.1} parent=1 // pred_check
      _
    $region27: #{tpu_custom_call.1} parent=1 // pred_check_branch
      %67 = sbr.rel (0) target = $region29
    $region28: #{tpu_custom_call.1} parent=1 // pred_region
      %69 = dma.done [#allocation6], 64
    $region29: #{tpu_custom_call.1} parent=1 // pred_fallthru
      _
    // Predicated region
    $region30: #{tpu_custom_call.1} parent=1 // pred_check
      _
    $region31: #{tpu_custom_call.1} parent=1 // pred_check_branch
      %71 = sbr.rel (0) target = $region33
    $region32: #{tpu_custom_call.1} parent=1 // pred_region
      %73 = dma.done [#allocation6], 5120
    $region33: #{tpu_custom_call.1} parent=1 // pred_fallthru
      _
    // Predicated region
    $region34: #{tpu_custom_call.1} parent=1 // pred_check
      _
    $region35: #{tpu_custom_call.1} parent=1 // pred_check_branch
      %75 = sbr.rel (0) target = $region37
    $region36: #{tpu_custom_call.1} parent=1 // pred_region
      %77 = dma.done [#allocation9], 128
    $region37: #{tpu_custom_call.1} parent=1 // pred_fallthru
      _
    %v79 = vld [vmem:[#allocation2] sm:$0xf]
    %v80 = vld [vmem:[#allocation5] sm:$0xf]
    %v81 = vld [vmem:[#allocation8] sm:$0x1]
    %v82 = vld [vmem:[#allocation8 + $0x1] sm:$0x1]
    %v83 = vld [vmem:[#allocation8 + $0x2] sm:$0x1]
    %v84 = vld [vmem:[#allocation8 + $0x3] sm:$0x1]
    %v85 = vld [vmem:[#allocation8 + $0x4] sm:$0x1]
    %v86 = vld [vmem:[#allocation8 + $0x5] sm:$0x1]
    %v87 = vld [vmem:[#allocation7] sm:$0xf]
    %v88 = vld [vmem:[#allocation7 + $0x4] sm:$0xf]
    %v89 = vld [vmem:[#allocation7 + $0x8] sm:$0xf]
    %v90 = vld [vmem:[#allocation7 + $0xc] sm:$0xf]
    %v91 = vld [vmem:[#allocation7 + $0x10] sm:$0xf]
    %v92 = vld [vmem:[#allocation7 + $0x14] sm:$0xf]
    %v93 = vld [vmem:[#allocation7 + $0x18] sm:$0xf]
    %v94 = vld [vmem:[#allocation7 + $0x1c] sm:$0xf]
    %v95 = vld [vmem:[#allocation7 + $0x20] sm:$0xf]
    %v96 = vld [vmem:[#allocation7 + $0x24] sm:$0xf]
    %v97 = vld [vmem:[#allocation7 + $0x28] sm:$0xf]
    %v98 = vld [vmem:[#allocation7 + $0x2c] sm:$0xf]
    %v99 = vld [vmem:[#allocation7 + $0x30] sm:$0xf]
    %v100 = vld [vmem:[#allocation7 + $0x34] sm:$0xf]
    %v101 = vld [vmem:[#allocation7 + $0x38] sm:$0xf]
    %v102 = vld [vmem:[#allocation7 + $0x3c] sm:$0xf]
    %s103 = scalar_lea.vmem [#allocation7], 64
    %v104 = vld [vmem:[%s103] sm:$0xf]
    %v105 = vld [vmem:[%s103 + $0x4] sm:$0xf]
    %v106 = vld [vmem:[%s103 + $0x8] sm:$0xf]
    %v107 = vld [vmem:[%s103 + $0xc] sm:$0xf]
    %v108 = vld [vmem:[%s103 + $0x10] sm:$0xf]
    %v109 = vld [vmem:[%s103 + $0x14] sm:$0xf]
    %v110 = vld [vmem:[%s103 + $0x18] sm:$0xf]
    %v111 = vld [vmem:[%s103 + $0x1c] sm:$0xf]
    %v112 = vld [vmem:[%s103 + $0x20] sm:$0xf]
    %v113 = vld [vmem:[%s103 + $0x24] sm:$0xf]
    %v114 = vld [vmem:[%s103 + $0x28] sm:$0xf]
    %v115 = vld [vmem:[%s103 + $0x2c] sm:$0xf]
    %v116 = vld [vmem:[%s103 + $0x30] sm:$0xf]
    %v117 = vld [vmem:[%s103 + $0x34] sm:$0xf]
    %v118 = vld [vmem:[%s103 + $0x38] sm:$0xf]
    %v119 = vld [vmem:[%s103 + $0x3c] sm:$0xf]
    %v136 = vunpack.c.l.b16 %v104
    %v137 = vunpack.c.l.b16 %v105
    %v138 = vunpack.c.l.b16 %v106
    %v139 = vunpack.c.l.b16 %v107
    %v140 = vunpack.c.l.b16 %v108
    %v141 = vunpack.c.l.b16 %v109
    %v142 = vunpack.c.l.b16 %v110
    %v143 = vunpack.c.l.b16 %v111
    %v144 = vunpack.c.l.b16 %v112
    %v145 = vunpack.c.l.b16 %v113
    %v146 = vunpack.c.l.b16 %v114
    %v147 = vunpack.c.l.b16 %v115
    %v148 = vunpack.c.l.b16 %v116
    %v149 = vunpack.c.l.b16 %v117
    %v150 = vunpack.c.l.b16 %v118
    %v151 = vunpack.c.l.b16 %v119
    %v152 = vpack.c.b16 %v137, %v136
    %v153 = vpack.c.b16 %v139, %v138
    %v154 = vpack.c.b16 %v141, %v140
    %v155 = vpack.c.b16 %v143, %v142
    %v156 = vpack.c.b16 %v145, %v144
    %v157 = vpack.c.b16 %v147, %v146
    %v158 = vpack.c.b16 %v149, %v148
    %v159 = vpack.c.b16 %v151, %v150
    %168 = vmatpush.bf16.msra.mxu0 %v159
    %169 = vmatpush.bf16.msra.mxu0 %v158
    %170 = vmatpush.bf16.msra.mxu0 %v157
    %171 = vmatpush.bf16.msra.mxu0 %v156
    %172 = vmatpush.bf16.msra.mxu0 %v155
    %173 = vmatpush.bf16.msra.mxu0 %v154
    %174 = vmatpush.bf16.msra.mxu0 %v153
    %175 = vmatpush.bf16.msra.mxu0 %v152
    %176 = vmatmul.bf16.gmra.mxu0 %v80
    %v177 = vpop.f32.mrf.mxu0
    %v178 = vadd.f32 0.0, %v177
    %v179 = vpop.f32.mrf.mxu0
    %180 = vdwg.mxu0
    %v197 = vunpack.c.l.b16 %v87
    %v198 = vunpack.c.l.b16 %v88
    %v199 = vunpack.c.l.b16 %v89
    %v200 = vunpack.c.l.b16 %v90
    %v201 = vunpack.c.l.b16 %v91
    %v202 = vunpack.c.l.b16 %v92
    %v203 = vunpack.c.l.b16 %v93
    %v204 = vunpack.c.l.b16 %v94
    %v205 = vunpack.c.l.b16 %v95
    %v206 = vunpack.c.l.b16 %v96
    %v207 = vunpack.c.l.b16 %v97
    %v208 = vunpack.c.l.b16 %v98
    %v209 = vunpack.c.l.b16 %v99
    %v210 = vunpack.c.l.b16 %v100
    %v211 = vunpack.c.l.b16 %v101
    %v212 = vunpack.c.l.b16 %v102
    %v213 = vpack.c.b16 %v198, %v197
    %v214 = vpack.c.b16 %v200, %v199
    %v215 = vpack.c.b16 %v202, %v201
    %v216 = vpack.c.b16 %v204, %v203
    %v217 = vpack.c.b16 %v206, %v205
    %v218 = vpack.c.b16 %v208, %v207
    %v219 = vpack.c.b16 %v210, %v209
    %v220 = vpack.c.b16 %v212, %v211
    %229 = vmatpush.bf16.msra.mxu0 %v220
    %230 = vmatpush.bf16.msra.mxu0 %v219
    %231 = vmatpush.bf16.msra.mxu0 %v218
    %232 = vmatpush.bf16.msra.mxu0 %v217
    %233 = vmatpush.bf16.msra.mxu0 %v216
    %234 = vmatpush.bf16.msra.mxu0 %v215
    %235 = vmatpush.bf16.msra.mxu0 %v214
    %236 = vmatpush.bf16.msra.mxu0 %v213
    %237 = vmatmul.bf16.gmra.mxu0 %v79
    %v238 = vpop.f32.mrf.mxu0
    %v239 = vadd.f32 %v178, %v238
    %v240 = vpop.f32.mrf.mxu0
    %241 = vdwg.mxu0
    %v242 = vperm.slane %v81, 0
    %v243 = vadd.f32 %v239, %v242
    %vm244 = vcmp.gt.f32.partialorder %v243, 0.0
    %v245 = vperm.slane %v82, 0
    %v246 = vmul.f32 %v245, %v243
    %v247 = vsel %vm244, %v243, %v246
    %v248 = vpack.c.bf16 %v247, %v247
    %s249 = scalar_lea.vmem [#allocation7], 128
    %v250 = vld [vmem:[%s249] sm:$0xf]
    %v251 = vld [vmem:[%s249 + $0x4] sm:$0xf]
    %v252 = vld [vmem:[%s249 + $0x8] sm:$0xf]
    %v253 = vld [vmem:[%s249 + $0xc] sm:$0xf]
    %v254 = vld [vmem:[%s249 + $0x10] sm:$0xf]
    %v255 = vld [vmem:[%s249 + $0x14] sm:$0xf]
    %v256 = vld [vmem:[%s249 + $0x18] sm:$0xf]
    %v257 = vld [vmem:[%s249 + $0x1c] sm:$0xf]
    %v258 = vld [vmem:[%s249 + $0x20] sm:$0xf]
    %v259 = vld [vmem:[%s249 + $0x24] sm:$0xf]
    %v260 = vld [vmem:[%s249 + $0x28] sm:$0xf]
    %v261 = vld [vmem:[%s249 + $0x2c] sm:$0xf]
    %v262 = vld [vmem:[%s249 + $0x30] sm:$0xf]
    %v263 = vld [vmem:[%s249 + $0x34] sm:$0xf]
    %v264 = vld [vmem:[%s249 + $0x38] sm:$0xf]
    %v265 = vld [vmem:[%s249 + $0x3c] sm:$0xf]
    %v266 = vperm.slane %v83, 0
    %v283 = vunpack.c.l.b16 %v250
    %v284 = vunpack.c.l.b16 %v251
    %v285 = vunpack.c.l.b16 %v252
    %v286 = vunpack.c.l.b16 %v253
    %v287 = vunpack.c.l.b16 %v254
    %v288 = vunpack.c.l.b16 %v255
    %v289 = vunpack.c.l.b16 %v256
    %v290 = vunpack.c.l.b16 %v257
    %v291 = vunpack.c.l.b16 %v258
    %v292 = vunpack.c.l.b16 %v259
    %v293 = vunpack.c.l.b16 %v260
    %v294 = vunpack.c.l.b16 %v261
    %v295 = vunpack.c.l.b16 %v262
    %v296 = vunpack.c.l.b16 %v263
    %v297 = vunpack.c.l.b16 %v264
    %v298 = vunpack.c.l.b16 %v265
    %v299 = vpack.c.b16 %v284, %v283
    %v300 = vpack.c.b16 %v286, %v285
    %v301 = vpack.c.b16 %v288, %v287
    %v302 = vpack.c.b16 %v290, %v289
    %v303 = vpack.c.b16 %v292, %v291
    %v304 = vpack.c.b16 %v294, %v293
    %v305 = vpack.c.b16 %v296, %v295
    %v306 = vpack.c.b16 %v298, %v297
    %315 = vmatpush.bf16.msra.mxu0 %v306
    %316 = vmatpush.bf16.msra.mxu0 %v305
    %317 = vmatpush.bf16.msra.mxu0 %v304
    %318 = vmatpush.bf16.msra.mxu0 %v303
    %319 = vmatpush.bf16.msra.mxu0 %v302
    %320 = vmatpush.bf16.msra.mxu0 %v301
    %321 = vmatpush.bf16.msra.mxu0 %v300
    %322 = vmatpush.bf16.msra.mxu0 %v299
    %323 = vmatmul.bf16.gmra.mxu0 %v248
    %v324 = vpop.f32.mrf.mxu0
    %v325 = vadd.f32 %v266, %v324
    %v326 = vpop.f32.mrf.mxu0
    %327 = vdwg.mxu0
    %v328 = vpack.c.bf16 %v325, %v325
    %s329 = scalar_lea.vmem [#allocation7], 192
    %v330 = vld [vmem:[%s329] sm:$0xf]
    %v331 = vld [vmem:[%s329 + $0x4] sm:$0xf]
    %v332 = vld [vmem:[%s329 + $0x8] sm:$0xf]
    %v333 = vld [vmem:[%s329 + $0xc] sm:$0xf]
    %v334 = vld [vmem:[%s329 + $0x10] sm:$0xf]
    %v335 = vld [vmem:[%s329 + $0x14] sm:$0xf]
    %v336 = vld [vmem:[%s329 + $0x18] sm:$0xf]
    %v337 = vld [vmem:[%s329 + $0x1c] sm:$0xf]
    %v338 = vld [vmem:[%s329 + $0x20] sm:$0xf]
    %v339 = vld [vmem:[%s329 + $0x24] sm:$0xf]
    %v340 = vld [vmem:[%s329 + $0x28] sm:$0xf]
    %v341 = vld [vmem:[%s329 + $0x2c] sm:$0xf]
    %v342 = vld [vmem:[%s329 + $0x30] sm:$0xf]
    %v343 = vld [vmem:[%s329 + $0x34] sm:$0xf]
    %v344 = vld [vmem:[%s329 + $0x38] sm:$0xf]
    %v345 = vld [vmem:[%s329 + $0x3c] sm:$0xf]
    %v346 = vperm.slane %v84, 0
    %v363 = vunpack.c.l.b16 %v330
    %v364 = vunpack.c.l.b16 %v331
    %v365 = vunpack.c.l.b16 %v332
    %v366 = vunpack.c.l.b16 %v333
    %v367 = vunpack.c.l.b16 %v334
    %v368 = vunpack.c.l.b16 %v335
    %v369 = vunpack.c.l.b16 %v336
    %v370 = vunpack.c.l.b16 %v337
    %v371 = vunpack.c.l.b16 %v338
    %v372 = vunpack.c.l.b16 %v339
    %v373 = vunpack.c.l.b16 %v340
    %v374 = vunpack.c.l.b16 %v341
    %v375 = vunpack.c.l.b16 %v342
    %v376 = vunpack.c.l.b16 %v343
    %v377 = vunpack.c.l.b16 %v344
    %v378 = vunpack.c.l.b16 %v345
    %v379 = vpack.c.b16 %v364, %v363
    %v380 = vpack.c.b16 %v366, %v365
    %v381 = vpack.c.b16 %v368, %v367
    %v382 = vpack.c.b16 %v370, %v369
    %v383 = vpack.c.b16 %v372, %v371
    %v384 = vpack.c.b16 %v374, %v373
    %v385 = vpack.c.b16 %v376, %v375
    %v386 = vpack.c.b16 %v378, %v377
    %395 = vmatpush.bf16.msra.mxu0 %v386
    %396 = vmatpush.bf16.msra.mxu0 %v385
    %397 = vmatpush.bf16.msra.mxu0 %v384
    %398 = vmatpush.bf16.msra.mxu0 %v383
    %399 = vmatpush.bf16.msra.mxu0 %v382
    %400 = vmatpush.bf16.msra.mxu0 %v381
    %401 = vmatpush.bf16.msra.mxu0 %v380
    %402 = vmatpush.bf16.msra.mxu0 %v379
    %403 = vmatmul.bf16.gmra.mxu0 %v328
    %v404 = vpop.f32.mrf.mxu0
    %v405 = vadd.f32 %v346, %v404
    %v406 = vpop.f32.mrf.mxu0
    %407 = vdwg.mxu0
    %v408 = vmax.f32 %v405, 0.0
    %v409 = vpack.c.bf16 %v408, %v408
    %s410 = scalar_lea.vmem [#allocation7], 256
    %v411 = vld [vmem:[%s410] sm:$0xf]
    %v412 = vld [vmem:[%s410 + $0x4] sm:$0xf]
    %v413 = vld [vmem:[%s410 + $0x8] sm:$0xf]
    %v414 = vld [vmem:[%s410 + $0xc] sm:$0xf]
    %v415 = vld [vmem:[%s410 + $0x10] sm:$0xf]
    %v416 = vld [vmem:[%s410 + $0x14] sm:$0xf]
    %v417 = vld [vmem:[%s410 + $0x18] sm:$0xf]
    %v418 = vld [vmem:[%s410 + $0x1c] sm:$0xf]
    %v419 = vld [vmem:[%s410 + $0x20] sm:$0xf]
    %v420 = vld [vmem:[%s410 + $0x24] sm:$0xf]
    %v421 = vld [vmem:[%s410 + $0x28] sm:$0xf]
    %v422 = vld [vmem:[%s410 + $0x2c] sm:$0xf]
    %v423 = vld [vmem:[%s410 + $0x30] sm:$0xf]
    %v424 = vld [vmem:[%s410 + $0x34] sm:$0xf]
    %v425 = vld [vmem:[%s410 + $0x38] sm:$0xf]
    %v426 = vld [vmem:[%s410 + $0x3c] sm:$0xf]
    %v427 = vperm.slane %v85, 0
    %v444 = vunpack.c.l.b16 %v411
    %v445 = vunpack.c.l.b16 %v412
    %v446 = vunpack.c.l.b16 %v413
    %v447 = vunpack.c.l.b16 %v414
    %v448 = vunpack.c.l.b16 %v415
    %v449 = vunpack.c.l.b16 %v416
    %v450 = vunpack.c.l.b16 %v417
    %v451 = vunpack.c.l.b16 %v418
    %v452 = vunpack.c.l.b16 %v419
    %v453 = vunpack.c.l.b16 %v420
    %v454 = vunpack.c.l.b16 %v421
    %v455 = vunpack.c.l.b16 %v422
    %v456 = vunpack.c.l.b16 %v423
    %v457 = vunpack.c.l.b16 %v424
    %v458 = vunpack.c.l.b16 %v425
    %v459 = vunpack.c.l.b16 %v426
    %v460 = vpack.c.b16 %v445, %v444
    %v461 = vpack.c.b16 %v447, %v446
    %v462 = vpack.c.b16 %v449, %v448
    %v463 = vpack.c.b16 %v451, %v450
    %v464 = vpack.c.b16 %v453, %v452
    %v465 = vpack.c.b16 %v455, %v454
    %v466 = vpack.c.b16 %v457, %v456
    %v467 = vpack.c.b16 %v459, %v458
    %476 = vmatpush.bf16.msra.mxu0 %v467
    %477 = vmatpush.bf16.msra.mxu0 %v466
    %478 = vmatpush.bf16.msra.mxu0 %v465
    %479 = vmatpush.bf16.msra.mxu0 %v464
    %480 = vmatpush.bf16.msra.mxu0 %v463
    %481 = vmatpush.bf16.msra.mxu0 %v462
    %482 = vmatpush.bf16.msra.mxu0 %v461
    %483 = vmatpush.bf16.msra.mxu0 %v460
    %484 = vmatmul.bf16.gmra.mxu0 %v409
    %v485 = vpop.f32.mrf.mxu0
    %v486 = vadd.f32 %v427, %v485
    %v487 = vpop.f32.mrf.mxu0
    %488 = vdwg.mxu0
    %v489 = vmax.f32 %v486, 0.0
    %v490 = vld [vmem:[%s3] sm:$0x3]
    %v491 = vpack.c.bf16 %v489, %v489
    %s493 = vtos %v86
    %v494 = vstv %s493
    %496 = vmatpush.bf16.xpose.msra.mxu0 0
    %497 = vmatpush.bf16.xpose.msra.mxu0 0
    %498 = vmatpush.bf16.xpose.msra.mxu0 0
    %499 = vmatpush.bf16.xpose.msra.mxu0 0
    %500 = vmatpush.bf16.xpose.msra.mxu0 0
    %501 = vmatpush.bf16.xpose.msra.mxu0 0
    %502 = vmatpush.bf16.xpose.msra.mxu0 0
    %503 = vmatpush.bf16.xpose.msra.mxu0 %v491
    %504 = vmatmul.bf16.gmra.mxu0 %v490
    %v505 = vpop.f32.mrf.mxu0
    %v506 = vadd.f32 %v494, %v505
    %v507 = vpop.f32.mrf.mxu0
    %508 = vdwg.mxu0
    %vm509 = vcmask 60416
    %510 = vst.msk [vmem:[#allocation10] sm:$0xf] %vm509, %v506
    // Predicated region
    $region38: #{tpu_custom_call.1} parent=1 // pred_check
      _
    $region39: #{tpu_custom_call.1} parent=1 // pred_check_branch
      %512 = sbr.rel (0) target = $region41
    $region40: #{tpu_custom_call.1} parent=1 // pred_region
      %514 = vsyncadd [#allocation4], 0
      %s516 = sshll.u32 [#allocation10], 4
      %s517 = int_to_ptr.vmem [resolvable:$true] %s516
      %s518 = sshll.u32 %s5, 4
      %s519 = int_to_ptr.hbm [resolvable:$true] %s518
      %521 = dma.vmem_to_hbm [thread:$0]  %s517, 64, %s519, [#allocation4]
    $region41: #{tpu_custom_call.1} parent=1 // pred_fallthru
      _
    // Predicated region
    $region42: #{tpu_custom_call.1} parent=1 // pred_check
      _
    $region43: #{tpu_custom_call.1} parent=1 // pred_check_branch
      %523 = sbr.rel (0) target = $region45
    $region44: #{tpu_custom_call.1} parent=1 // pred_region
      %525 = dma.done [#allocation4], 64
    $region45: #{tpu_custom_call.1} parent=1 // pred_fallthru
      _
    %526 = vsyncpa [#allocation3], 1
    %527 = vsyncpa [#allocation6], 1
    %528 = vsyncpa [#allocation9], 1
    %529 = vsyncpa [#allocation4], 1

</llo_original>
